<compile_context>
chip_gen: v6e
topology: v6e:2x2x1
jax: 0.10.0
libtpu: 0.0.40
codegen_flags: <defaults>
</compile_context>

<pallas_src>
import jax
import jax.numpy as jnp
from jax import lax
from jax.experimental import pallas as pl
from jax.experimental.pallas import tpu as pltpu

# Small config consistent with the module
B, L = 2, 8          # batch, sequence (x is 3-D per apply_film's assert)
E = 32               # embed_dim
M = 64               # mlp_dim (hidden width of both MLPs)
T = 32               # temb input dim
V = 128              # vocab_size -> out_dim (readout_dim == 0); 128 keeps output stores lane-dense
R = 2                # config.num_output_ffresiduals
EPS = 1e-5           # PyTorch LayerNorm default eps

_SQRT_2_OVER_PI = 0.7978845608028654


def _gelu(x):
    # tanh-approximate GELU (see TODO above re: exact erf form)
    return 0.5 * x * (1.0 + jnp.tanh(_SQRT_2_OVER_PI * (x + 0.044715 * x * x * x)))


def _mm_t(a, w):
    # a @ w.T  (w stored PyTorch-style as (out, in)); f32 accumulation, default MXU precision.
    return lax.dot_general(a, w, (((1,), (1,)), ((), ())),
                           preferred_element_type=jnp.float32)


def residual_readout_kernel(x_ref, temb_ref,
                            wt1_ref, bt1_ref, wt2_ref, bt2_ref,
                            wf_ref, bf_ref,
                            wz1_ref, bz1_ref, wz2_ref, bz2_ref,
                            gamma_ref, beta_ref,
                            wlg_ref, blg_ref,
                            o_ref):
    x = x_ref[...].astype(jnp.float32)                     # (B, L, E)
    xf = x.reshape(B * L, E)                               # token slab for all matmuls
    temb = temb_ref[...].astype(jnp.float32)               # (B, T)

    # --- temb MLP: Linear(T->M) -> GELU -> Linear(M->4E)  (loop-invariant, hoisted) ---
    h = _gelu(_mm_t(temb, wt1_ref[...]) + bt1_ref[...])    # (B, M)
    temb4 = _mm_t(h, wt2_ref[...]) + bt2_ref[...]          # (B, 4E)

    # --- FiLM params: same layer + same temb every iteration -> hoisted out of the loop ---
    film = _mm_t(temb4, wf_ref[...]) + bf_ref[...]         # (B, 2E)
    a = film[:, :E]                                        # (B, E)
    b = film[:, E:]                                        # (B, E)
    # broadcast per-batch film to per-token rows once (hoisted; not re-broadcast in the loop)
    a_tok = jnp.broadcast_to(a[:, None, :], (B, L, E)).reshape(B * L, E)
    b_tok = jnp.broadcast_to(b[:, None, :], (B, L, E)).reshape(B * L, E)

    gamma = gamma_ref[...]                                 # (1, E)
    beta = beta_ref[...]                                   # (1, E)

    # --- residual FiLM blocks (static unrolled loop, R is tiny) ---
    for _ in range(R):
        z = _gelu(_mm_t(xf, wz1_ref[...]) + bz1_ref[...])  # (B*L, M)
        z = _mm_t(z, wz2_ref[...]) + bz2_ref[...]          # (B*L, E)
        xr = xf + z
        mu = jnp.mean(xr, axis=-1, keepdims=True)
        xc = xr - mu
        var = jnp.mean(xc * xc, axis=-1, keepdims=True)
        xn = xc * lax.rsqrt(var + EPS) * gamma + beta      # LayerNorm (affine)
        xf = a_tok * xn + b_tok                            # apply_film

    # --- logits head: Linear(E -> V); V=128 -> lane-dense store ---
    logits = _mm_t(xf, wlg_ref[...]) + blg_ref[...]        # (B*L, V)
    o_ref[...] = logits.reshape(B, L, V).astype(o_ref.dtype)


def _full_spec(shape):
    nd = len(shape)
    return pl.BlockSpec(shape, lambda i, nd=nd: (0,) * nd)


@jax.jit
def residual_readout(x, temb, params):
    (wt1, bt1, wt2, bt2, wf, bf, wz1, bz1, wz2, bz2, gamma, beta, wlg, blg) = params
    in_arrays = (x, temb, wt1, bt1, wt2, bt2, wf, bf, wz1, bz1, wz2, bz2, gamma, beta, wlg, blg)
    return pl.pallas_call(
        residual_readout_kernel,
        out_shape=jax.ShapeDtypeStruct((B, L, V), x.dtype),
        grid_spec=pltpu.PrefetchScalarGridSpec(
            num_scalar_prefetch=0,
            grid=(1,),                                     # collapsed: one program, one DMA set
            in_specs=[_full_spec(a.shape) for a in in_arrays],
            out_specs=_full_spec((B, L, V)),
        ),
        compiler_params=pltpu.CompilerParams(dimension_semantics=("arbitrary",)),
    )(*in_arrays)


def reference(x, temb, params):
    """Pure-JAX reference of the same forward pass (HIGHEST precision, for validation)."""
    (wt1, bt1, wt2, bt2, wf, bf, wz1, bz1, wz2, bz2, gamma, beta, wlg, blg) = params
    hp = jax.lax.Precision.HIGHEST

    def lin(a, w, b2):
        return jnp.einsum('...i,oi->...o', a, w, precision=hp) + b2[0]

    t = _gelu(lin(temb, wt1, bt1))
    t = lin(t, wt2, bt2)
    film = lin(t, wf, bf)
    fa = film[:, None, :E]
    fb = film[:, None, E:]
    xx = x
    for _ in range(R):
        z = _gelu(lin(xx, wz1, bz1))
        z = lin(z, wz2, bz2)
        xr = xx + z
        mu = xr.mean(-1, keepdims=True)
        var = ((xr - mu) ** 2).mean(-1, keepdims=True)
        xn = (xr - mu) / jnp.sqrt(var + EPS) * gamma[0] + beta[0]
        xx = fa * xn + fb
    return lin(xx, wlg, blg)


if __name__ == "__main__":
    key = jax.random.PRNGKey(0)
    ks = jax.random.split(key, 16)

    x = jax.random.normal(ks[0], (B, L, E), jnp.float32)
    temb = jax.random.normal(ks[1], (B, T), jnp.float32)

    def xavier(k, shape):
        fan_out, fan_in = shape
        lim = (6.0 / (fan_in + fan_out)) ** 0.5
        return jax.random.uniform(k, shape, jnp.float32, -lim, lim)

    wt1 = xavier(ks[2], (M, T));        bt1 = 0.02 * jax.random.normal(ks[3], (1, M), jnp.float32)
    wt2 = xavier(ks[4], (4 * E, M));    bt2 = 0.02 * jax.random.normal(ks[5], (1, 4 * E), jnp.float32)
    wf  = xavier(ks[6], (2 * E, 4 * E)); bf = 0.02 * jax.random.normal(ks[7], (1, 2 * E), jnp.float32)
    wz1 = xavier(ks[8], (M, E));        bz1 = 0.02 * jax.random.normal(ks[9], (1, M), jnp.float32)
    wz2 = xavier(ks[10], (E, M));       bz2 = 0.02 * jax.random.normal(ks[11], (1, E), jnp.float32)
    gamma = 1.0 + 0.1 * jax.random.normal(ks[12], (1, E), jnp.float32)
    beta = 0.05 * jax.random.normal(ks[13], (1, E), jnp.float32)
    wlg = xavier(ks[14], (V, E));       blg = 0.02 * jax.random.normal(ks[15], (1, V), jnp.float32)
    params = (wt1, bt1, wt2, bt2, wf, bf, wz1, bz1, wz2, bz2, gamma, beta, wlg, blg)

    out = residual_readout(x, temb, params)
    out = jax.block_until_ready(out)

    ref = reference(x, temb, params)
    assert out.shape == (B, L, V)
    err = float(jnp.max(jnp.abs(out - ref)))
    # tolerance accounts for default (non-'highest') MXU matmul passes in the kernel
    assert jnp.allclose(out, ref, atol=5e-2, rtol=5e-2), f"max abs err {err}"
    print("KERNEL_OK")
</pallas_src>

<mosaic_0001>
module attributes {stable_mosaic.version = 11 : i64} {
  func.func @residual_readout_kernel(%arg0: i32, %arg1: memref<2x8x32xf32, #tpu.memory_space<vmem>>, %arg2: memref<2x32xf32, #tpu.memory_space<vmem>>, %arg3: memref<64x32xf32, #tpu.memory_space<vmem>>, %arg4: memref<1x64xf32, #tpu.memory_space<vmem>>, %arg5: memref<128x64xf32, #tpu.memory_space<vmem>>, %arg6: memref<1x128xf32, #tpu.memory_space<vmem>>, %arg7: memref<64x128xf32, #tpu.memory_space<vmem>>, %arg8: memref<1x64xf32, #tpu.memory_space<vmem>>, %arg9: memref<64x32xf32, #tpu.memory_space<vmem>>, %arg10: memref<1x64xf32, #tpu.memory_space<vmem>>, %arg11: memref<32x64xf32, #tpu.memory_space<vmem>>, %arg12: memref<1x32xf32, #tpu.memory_space<vmem>>, %arg13: memref<1x32xf32, #tpu.memory_space<vmem>>, %arg14: memref<1x32xf32, #tpu.memory_space<vmem>>, %arg15: memref<128x32xf32, #tpu.memory_space<vmem>>, %arg16: memref<1x128xf32, #tpu.memory_space<vmem>>, %arg17: memref<2x8x128xf32, #tpu.memory_space<vmem>>) attributes {dimension_semantics = [#tpu.dimension_semantics<arbitrary>], iteration_bounds = array<i64: 1>, scalar_prefetch = 0 : i64, scratch_operands = 0 : i64, tpu.core_type = #tpu.core_type<tc>, window_params = [{pipeline_mode = #tpu.pipeline_mode<synchronous>, transform_indices = @transform_0, window_bounds = array<i64: 2, 8, 32>}, {pipeline_mode = #tpu.pipeline_mode<synchronous>, transform_indices = @transform_1, window_bounds = array<i64: 2, 32>}, {pipeline_mode = #tpu.pipeline_mode<synchronous>, transform_indices = @transform_2, window_bounds = array<i64: 64, 32>}, {pipeline_mode = #tpu.pipeline_mode<synchronous>, transform_indices = @transform_3, window_bounds = array<i64: 1, 64>}, {pipeline_mode = #tpu.pipeline_mode<synchronous>, transform_indices = @transform_4, window_bounds = array<i64: 128, 64>}, {pipeline_mode = #tpu.pipeline_mode<synchronous>, transform_indices = @transform_5, window_bounds = array<i64: 1, 128>}, {pipeline_mode = #tpu.pipeline_mode<synchronous>, transform_indices = @transform_6, window_bounds = array<i64: 64, 128>}, {pipeline_mode = #tpu.pipeline_mode<synchronous>, transform_indices = @transform_7, window_bounds = array<i64: 1, 64>}, {pipeline_mode = #tpu.pipeline_mode<synchronous>, transform_indices = @transform_8, window_bounds = array<i64: 64, 32>}, {pipeline_mode = #tpu.pipeline_mode<synchronous>, transform_indices = @transform_9, window_bounds = array<i64: 1, 64>}, {pipeline_mode = #tpu.pipeline_mode<synchronous>, transform_indices = @transform_10, window_bounds = array<i64: 32, 64>}, {pipeline_mode = #tpu.pipeline_mode<synchronous>, transform_indices = @transform_11, window_bounds = array<i64: 1, 32>}, {pipeline_mode = #tpu.pipeline_mode<synchronous>, transform_indices = @transform_12, window_bounds = array<i64: 1, 32>}, {pipeline_mode = #tpu.pipeline_mode<synchronous>, transform_indices = @transform_13, window_bounds = array<i64: 1, 32>}, {pipeline_mode = #tpu.pipeline_mode<synchronous>, transform_indices = @transform_14, window_bounds = array<i64: 128, 32>}, {pipeline_mode = #tpu.pipeline_mode<synchronous>, transform_indices = @transform_15, window_bounds = array<i64: 1, 128>}, {pipeline_mode = #tpu.pipeline_mode<synchronous>, transform_indices = @transform_16, window_bounds = array<i64: 2, 8, 128>}]} {
    %c0 = arith.constant 0 : index
    %c0_0 = arith.constant 0 : index
    %c0_1 = arith.constant 0 : index
    %0 = vector.load %arg1[%c0, %c0_0, %c0_1] : memref<2x8x32xf32, #tpu.memory_space<vmem>>, vector<2x8x32xf32>
    %1 = vector.shape_cast %0 : vector<2x8x32xf32> to vector<16x32xf32>
    %c0_2 = arith.constant 0 : index
    %c0_3 = arith.constant 0 : index
    %2 = vector.load %arg2[%c0_2, %c0_3] : memref<2x32xf32, #tpu.memory_space<vmem>>, vector<2x32xf32>
    %c0_4 = arith.constant 0 : index
    %c0_5 = arith.constant 0 : index
    %3 = vector.load %arg3[%c0_4, %c0_5] : memref<64x32xf32, #tpu.memory_space<vmem>>, vector<64x32xf32>
    %cst = arith.constant dense<0.000000e+00> : vector<2x64xf32>
    %4 = tpu.matmul %2, %3, %cst {dimension_numbers = #tpu.dot_dimension_numbers<[1], [1], [0], [0], [0, 0, 1, 0], [], []>} : vector<2x32xf32>, vector<64x32xf32>, vector<2x64xf32> -> vector<2x64xf32>
    %c0_6 = arith.constant 0 : index
    %c0_7 = arith.constant 0 : index
    %5 = vector.load %arg4[%c0_6, %c0_7] : memref<1x64xf32, #tpu.memory_space<vmem>>, vector<1x64xf32>
    %6 = vector.broadcast %5 : vector<1x64xf32> to vector<2x64xf32>
    %7 = arith.addf %4, %6 : vector<2x64xf32>
    %cst_8 = arith.constant 5.000000e-01 : f32
    %8 = vector.broadcast %cst_8 : f32 to vector<2x64xf32>
    %9 = arith.mulf %8, %7 : vector<2x64xf32>
    %cst_9 = arith.constant 4.471500e-02 : f32
    %10 = vector.broadcast %cst_9 : f32 to vector<2x64xf32>
    %11 = arith.mulf %10, %7 : vector<2x64xf32>
    %12 = arith.mulf %11, %7 : vector<2x64xf32>
    %13 = arith.mulf %12, %7 : vector<2x64xf32>
    %14 = arith.addf %7, %13 : vector<2x64xf32>
    %cst_10 = arith.constant 0.797884583 : f32
    %15 = vector.broadcast %cst_10 : f32 to vector<2x64xf32>
    %16 = arith.mulf %15, %14 : vector<2x64xf32>
    %17 = math.tanh %16 : vector<2x64xf32>
    %cst_11 = arith.constant 1.000000e+00 : f32
    %18 = vector.broadcast %cst_11 : f32 to vector<2x64xf32>
    %19 = arith.addf %18, %17 : vector<2x64xf32>
    %20 = arith.mulf %9, %19 : vector<2x64xf32>
    %c0_12 = arith.constant 0 : index
    %c0_13 = arith.constant 0 : index
    %21 = vector.load %arg5[%c0_12, %c0_13] : memref<128x64xf32, #tpu.memory_space<vmem>>, vector<128x64xf32>
    %cst_14 = arith.constant dense<0.000000e+00> : vector<2x128xf32>
    %22 = tpu.matmul %20, %21, %cst_14 {dimension_numbers = #tpu.dot_dimension_numbers<[1], [1], [0], [0], [0, 0, 1, 0], [], []>} : vector<2x64xf32>, vector<128x64xf32>, vector<2x128xf32> -> vector<2x128xf32>
    %c0_15 = arith.constant 0 : index
    %c0_16 = arith.constant 0 : index
    %23 = vector.load %arg6[%c0_15, %c0_16] : memref<1x128xf32, #tpu.memory_space<vmem>>, vector<1x128xf32>
    %24 = vector.broadcast %23 : vector<1x128xf32> to vector<2x128xf32>
    %25 = arith.addf %22, %24 : vector<2x128xf32>
    %c0_17 = arith.constant 0 : index
    %c0_18 = arith.constant 0 : index
    %26 = vector.load %arg7[%c0_17, %c0_18] : memref<64x128xf32, #tpu.memory_space<vmem>>, vector<64x128xf32>
    %cst_19 = arith.constant dense<0.000000e+00> : vector<2x64xf32>
    %27 = tpu.matmul %25, %26, %cst_19 {dimension_numbers = #tpu.dot_dimension_numbers<[1], [1], [0], [0], [0, 0, 1, 0], [], []>} : vector<2x128xf32>, vector<64x128xf32>, vector<2x64xf32> -> vector<2x64xf32>
    %c0_20 = arith.constant 0 : index
    %c0_21 = arith.constant 0 : index
    %28 = vector.load %arg8[%c0_20, %c0_21] : memref<1x64xf32, #tpu.memory_space<vmem>>, vector<1x64xf32>
    %29 = vector.broadcast %28 : vector<1x64xf32> to vector<2x64xf32>
    %30 = arith.addf %27, %29 : vector<2x64xf32>
    %31 = vector.extract_strided_slice %30 {offsets = [0, 0], sizes = [2, 32], strides = [1, 1]} : vector<2x64xf32> to vector<2x32xf32>
    %32 = vector.extract_strided_slice %30 {offsets = [0, 32], sizes = [2, 32], strides = [1, 1]} : vector<2x64xf32> to vector<2x32xf32>
    %33 = vector.shape_cast %31 : vector<2x32xf32> to vector<2x1x32xf32>
    %34 = vector.shape_cast %33 : vector<2x1x32xf32> to vector<2x1x32xf32>
    %35 = vector.broadcast %34 : vector<2x1x32xf32> to vector<2x8x32xf32>
    %36 = vector.shape_cast %35 : vector<2x8x32xf32> to vector<16x32xf32>
    %37 = vector.shape_cast %32 : vector<2x32xf32> to vector<2x1x32xf32>
    %38 = vector.shape_cast %37 : vector<2x1x32xf32> to vector<2x1x32xf32>
    %39 = vector.broadcast %38 : vector<2x1x32xf32> to vector<2x8x32xf32>
    %40 = vector.shape_cast %39 : vector<2x8x32xf32> to vector<16x32xf32>
    %c0_22 = arith.constant 0 : index
    %c0_23 = arith.constant 0 : index
    %41 = vector.load %arg13[%c0_22, %c0_23] : memref<1x32xf32, #tpu.memory_space<vmem>>, vector<1x32xf32>
    %c0_24 = arith.constant 0 : index
    %c0_25 = arith.constant 0 : index
    %42 = vector.load %arg14[%c0_24, %c0_25] : memref<1x32xf32, #tpu.memory_space<vmem>>, vector<1x32xf32>
    %c0_26 = arith.constant 0 : index
    %c0_27 = arith.constant 0 : index
    %43 = vector.load %arg9[%c0_26, %c0_27] : memref<64x32xf32, #tpu.memory_space<vmem>>, vector<64x32xf32>
    %cst_28 = arith.constant dense<0.000000e+00> : vector<16x64xf32>
    %44 = tpu.matmul %1, %43, %cst_28 {dimension_numbers = #tpu.dot_dimension_numbers<[1], [1], [0], [0], [0, 0, 1, 0], [], []>} : vector<16x32xf32>, vector<64x32xf32>, vector<16x64xf32> -> vector<16x64xf32>
    %c0_29 = arith.constant 0 : index
    %c0_30 = arith.constant 0 : index
    %45 = vector.load %arg10[%c0_29, %c0_30] : memref<1x64xf32, #tpu.memory_space<vmem>>, vector<1x64xf32>
    %46 = vector.broadcast %45 : vector<1x64xf32> to vector<16x64xf32>
    %47 = arith.addf %44, %46 : vector<16x64xf32>
    %cst_31 = arith.constant 5.000000e-01 : f32
    %48 = vector.broadcast %cst_31 : f32 to vector<16x64xf32>
    %49 = arith.mulf %48, %47 : vector<16x64xf32>
    %cst_32 = arith.constant 4.471500e-02 : f32
    %50 = vector.broadcast %cst_32 : f32 to vector<16x64xf32>
    %51 = arith.mulf %50, %47 : vector<16x64xf32>
    %52 = arith.mulf %51, %47 : vector<16x64xf32>
    %53 = arith.mulf %52, %47 : vector<16x64xf32>
    %54 = arith.addf %47, %53 : vector<16x64xf32>
    %cst_33 = arith.constant 0.797884583 : f32
    %55 = vector.broadcast %cst_33 : f32 to vector<16x64xf32>
    %56 = arith.mulf %55, %54 : vector<16x64xf32>
    %57 = math.tanh %56 : vector<16x64xf32>
    %cst_34 = arith.constant 1.000000e+00 : f32
    %58 = vector.broadcast %cst_34 : f32 to vector<16x64xf32>
    %59 = arith.addf %58, %57 : vector<16x64xf32>
    %60 = arith.mulf %49, %59 : vector<16x64xf32>
    %c0_35 = arith.constant 0 : index
    %c0_36 = arith.constant 0 : index
    %61 = vector.load %arg11[%c0_35, %c0_36] : memref<32x64xf32, #tpu.memory_space<vmem>>, vector<32x64xf32>
    %cst_37 = arith.constant dense<0.000000e+00> : vector<16x32xf32>
    %62 = tpu.matmul %60, %61, %cst_37 {dimension_numbers = #tpu.dot_dimension_numbers<[1], [1], [0], [0], [0, 0, 1, 0], [], []>} : vector<16x64xf32>, vector<32x64xf32>, vector<16x32xf32> -> vector<16x32xf32>
    %c0_38 = arith.constant 0 : index
    %c0_39 = arith.constant 0 : index
    %63 = vector.load %arg12[%c0_38, %c0_39] : memref<1x32xf32, #tpu.memory_space<vmem>>, vector<1x32xf32>
    %64 = vector.broadcast %63 : vector<1x32xf32> to vector<16x32xf32>
    %65 = arith.addf %62, %64 : vector<16x32xf32>
    %66 = arith.addf %1, %65 : vector<16x32xf32>
    %cst_40 = arith.constant dense<0.000000e+00> : vector<16xf32>
    %67 = vector.multi_reduction <add>, %66, %cst_40 [1] : vector<16x32xf32> to vector<16xf32>
    %68 = vector.shape_cast %67 : vector<16xf32> to vector<16x1xf32>
    %cst_41 = arith.constant 3.200000e+01 : f32
    %69 = vector.broadcast %cst_41 : f32 to vector<16x1xf32>
    %70 = arith.divf %68, %69 : vector<16x1xf32>
    %71 = vector.broadcast %70 : vector<16x1xf32> to vector<16x32xf32>
    %72 = arith.subf %66, %71 : vector<16x32xf32>
    %73 = arith.mulf %72, %72 : vector<16x32xf32>
    %cst_42 = arith.constant dense<0.000000e+00> : vector<16xf32>
    %74 = vector.multi_reduction <add>, %73, %cst_42 [1] : vector<16x32xf32> to vector<16xf32>
    %75 = vector.shape_cast %74 : vector<16xf32> to vector<16x1xf32>
    %cst_43 = arith.constant 3.200000e+01 : f32
    %76 = vector.broadcast %cst_43 : f32 to vector<16x1xf32>
    %77 = arith.divf %75, %76 : vector<16x1xf32>
    %cst_44 = arith.constant 9.99999974E-6 : f32
    %78 = vector.broadcast %cst_44 : f32 to vector<16x1xf32>
    %79 = arith.addf %77, %78 : vector<16x1xf32>
    %80 = math.rsqrt %79 : vector<16x1xf32>
    %81 = vector.broadcast %80 : vector<16x1xf32> to vector<16x32xf32>
    %82 = arith.mulf %72, %81 : vector<16x32xf32>
    %83 = vector.broadcast %41 : vector<1x32xf32> to vector<16x32xf32>
    %84 = arith.mulf %82, %83 : vector<16x32xf32>
    %85 = vector.broadcast %42 : vector<1x32xf32> to vector<16x32xf32>
    %86 = arith.addf %84, %85 : vector<16x32xf32>
    %87 = arith.mulf %36, %86 : vector<16x32xf32>
    %88 = arith.addf %87, %40 : vector<16x32xf32>
    %c0_45 = arith.constant 0 : index
    %c0_46 = arith.constant 0 : index
    %89 = vector.load %arg9[%c0_45, %c0_46] : memref<64x32xf32, #tpu.memory_space<vmem>>, vector<64x32xf32>
    %cst_47 = arith.constant dense<0.000000e+00> : vector<16x64xf32>
    %90 = tpu.matmul %88, %89, %cst_47 {dimension_numbers = #tpu.dot_dimension_numbers<[1], [1], [0], [0], [0, 0, 1, 0], [], []>} : vector<16x32xf32>, vector<64x32xf32>, vector<16x64xf32> -> vector<16x64xf32>
    %c0_48 = arith.constant 0 : index
    %c0_49 = arith.constant 0 : index
    %91 = vector.load %arg10[%c0_48, %c0_49] : memref<1x64xf32, #tpu.memory_space<vmem>>, vector<1x64xf32>
    %92 = vector.broadcast %91 : vector<1x64xf32> to vector<16x64xf32>
    %93 = arith.addf %90, %92 : vector<16x64xf32>
    %cst_50 = arith.constant 5.000000e-01 : f32
    %94 = vector.broadcast %cst_50 : f32 to vector<16x64xf32>
    %95 = arith.mulf %94, %93 : vector<16x64xf32>
    %cst_51 = arith.constant 4.471500e-02 : f32
    %96 = vector.broadcast %cst_51 : f32 to vector<16x64xf32>
    %97 = arith.mulf %96, %93 : vector<16x64xf32>
    %98 = arith.mulf %97, %93 : vector<16x64xf32>
    %99 = arith.mulf %98, %93 : vector<16x64xf32>
    %100 = arith.addf %93, %99 : vector<16x64xf32>
    %cst_52 = arith.constant 0.797884583 : f32
    %101 = vector.broadcast %cst_52 : f32 to vector<16x64xf32>
    %102 = arith.mulf %101, %100 : vector<16x64xf32>
    %103 = math.tanh %102 : vector<16x64xf32>
    %cst_53 = arith.constant 1.000000e+00 : f32
    %104 = vector.broadcast %cst_53 : f32 to vector<16x64xf32>
    %105 = arith.addf %104, %103 : vector<16x64xf32>
    %106 = arith.mulf %95, %105 : vector<16x64xf32>
    %c0_54 = arith.constant 0 : index
    %c0_55 = arith.constant 0 : index
    %107 = vector.load %arg11[%c0_54, %c0_55] : memref<32x64xf32, #tpu.memory_space<vmem>>, vector<32x64xf32>
    %cst_56 = arith.constant dense<0.000000e+00> : vector<16x32xf32>
    %108 = tpu.matmul %106, %107, %cst_56 {dimension_numbers = #tpu.dot_dimension_numbers<[1], [1], [0], [0], [0, 0, 1, 0], [], []>} : vector<16x64xf32>, vector<32x64xf32>, vector<16x32xf32> -> vector<16x32xf32>
    %c0_57 = arith.constant 0 : index
    %c0_58 = arith.constant 0 : index
    %109 = vector.load %arg12[%c0_57, %c0_58] : memref<1x32xf32, #tpu.memory_space<vmem>>, vector<1x32xf32>
    %110 = vector.broadcast %109 : vector<1x32xf32> to vector<16x32xf32>
    %111 = arith.addf %108, %110 : vector<16x32xf32>
    %112 = arith.addf %88, %111 : vector<16x32xf32>
    %cst_59 = arith.constant dense<0.000000e+00> : vector<16xf32>
    %113 = vector.multi_reduction <add>, %112, %cst_59 [1] : vector<16x32xf32> to vector<16xf32>
    %114 = vector.shape_cast %113 : vector<16xf32> to vector<16x1xf32>
    %cst_60 = arith.constant 3.200000e+01 : f32
    %115 = vector.broadcast %cst_60 : f32 to vector<16x1xf32>
    %116 = arith.divf %114, %115 : vector<16x1xf32>
    %117 = vector.broadcast %116 : vector<16x1xf32> to vector<16x32xf32>
    %118 = arith.subf %112, %117 : vector<16x32xf32>
    %119 = arith.mulf %118, %118 : vector<16x32xf32>
    %cst_61 = arith.constant dense<0.000000e+00> : vector<16xf32>
    %120 = vector.multi_reduction <add>, %119, %cst_61 [1] : vector<16x32xf32> to vector<16xf32>
    %121 = vector.shape_cast %120 : vector<16xf32> to vector<16x1xf32>
    %cst_62 = arith.constant 3.200000e+01 : f32
    %122 = vector.broadcast %cst_62 : f32 to vector<16x1xf32>
    %123 = arith.divf %121, %122 : vector<16x1xf32>
    %cst_63 = arith.constant 9.99999974E-6 : f32
    %124 = vector.broadcast %cst_63 : f32 to vector<16x1xf32>
    %125 = arith.addf %123, %124 : vector<16x1xf32>
    %126 = math.rsqrt %125 : vector<16x1xf32>
    %127 = vector.broadcast %126 : vector<16x1xf32> to vector<16x32xf32>
    %128 = arith.mulf %118, %127 : vector<16x32xf32>
    %129 = vector.broadcast %41 : vector<1x32xf32> to vector<16x32xf32>
    %130 = arith.mulf %128, %129 : vector<16x32xf32>
    %131 = vector.broadcast %42 : vector<1x32xf32> to vector<16x32xf32>
    %132 = arith.addf %130, %131 : vector<16x32xf32>
    %133 = arith.mulf %36, %132 : vector<16x32xf32>
    %134 = arith.addf %133, %40 : vector<16x32xf32>
    %c0_64 = arith.constant 0 : index
    %c0_65 = arith.constant 0 : index
    %135 = vector.load %arg15[%c0_64, %c0_65] : memref<128x32xf32, #tpu.memory_space<vmem>>, vector<128x32xf32>
    %cst_66 = arith.constant dense<0.000000e+00> : vector<16x128xf32>
    %136 = tpu.matmul %134, %135, %cst_66 {dimension_numbers = #tpu.dot_dimension_numbers<[1], [1], [0], [0], [0, 0, 1, 0], [], []>} : vector<16x32xf32>, vector<128x32xf32>, vector<16x128xf32> -> vector<16x128xf32>
    %c0_67 = arith.constant 0 : index
    %c0_68 = arith.constant 0 : index
    %137 = vector.load %arg16[%c0_67, %c0_68] : memref<1x128xf32, #tpu.memory_space<vmem>>, vector<1x128xf32>
    %138 = vector.broadcast %137 : vector<1x128xf32> to vector<16x128xf32>
    %139 = arith.addf %136, %138 : vector<16x128xf32>
    %140 = vector.shape_cast %139 : vector<16x128xf32> to vector<2x8x128xf32>
    %c0_69 = arith.constant 0 : index
    %c0_70 = arith.constant 0 : index
    %c0_71 = arith.constant 0 : index
    %141 = vector.load %arg17[%c0_69, %c0_70, %c0_71] : memref<2x8x128xf32, #tpu.memory_space<vmem>>, vector<2x8x128xf32>
    tpu.vector_store %arg17[%c0_69, %c0_70, %c0_71], %140 {strides = array<i32>} : memref<2x8x128xf32, #tpu.memory_space<vmem>>, vector<2x8x128xf32>,
    return
  }
  func.func @transform_0(%arg0: i32) -> (i32, i32, i32) {
    %c0_i32 = arith.constant 0 : i32
    %c0_i32_0 = arith.constant 0 : i32
    %c0_i32_1 = arith.constant 0 : i32
    %c0_i32_2 = arith.constant 0 : i32
    return %c0_i32, %c0_i32_0, %c0_i32_1 : i32, i32, i32
  }
  func.func @transform_1(%arg0: i32) -> (i32, i32) {
    %c0_i32 = arith.constant 0 : i32
    %c0_i32_0 = arith.constant 0 : i32
    %c0_i32_1 = arith.constant 0 : i32
    return %c0_i32, %c0_i32_0 : i32, i32
  }
  func.func @transform_2(%arg0: i32) -> (i32, i32) {
    %c0_i32 = arith.constant 0 : i32
    %c0_i32_0 = arith.constant 0 : i32
    %c0_i32_1 = arith.constant 0 : i32
    return %c0_i32, %c0_i32_0 : i32, i32
  }
  func.func @transform_3(%arg0: i32) -> (i32, i32) {
    %c0_i32 = arith.constant 0 : i32
    %c0_i32_0 = arith.constant 0 : i32
    %c0_i32_1 = arith.constant 0 : i32
    return %c0_i32, %c0_i32_0 : i32, i32
  }
  func.func @transform_4(%arg0: i32) -> (i32, i32) {
    %c0_i32 = arith.constant 0 : i32
    %c0_i32_0 = arith.constant 0 : i32
    %c0_i32_1 = arith.constant 0 : i32
    return %c0_i32, %c0_i32_0 : i32, i32
  }
  func.func @transform_5(%arg0: i32) -> (i32, i32) {
    %c0_i32 = arith.constant 0 : i32
    %c0_i32_0 = arith.constant 0 : i32
    %c0_i32_1 = arith.constant 0 : i32
    return %c0_i32, %c0_i32_0 : i32, i32
  }
  func.func @transform_6(%arg0: i32) -> (i32, i32) {
    %c0_i32 = arith.constant 0 : i32
    %c0_i32_0 = arith.constant 0 : i32
    %c0_i32_1 = arith.constant 0 : i32
    return %c0_i32, %c0_i32_0 : i32, i32
  }
  func.func @transform_7(%arg0: i32) -> (i32, i32) {
    %c0_i32 = arith.constant 0 : i32
    %c0_i32_0 = arith.constant 0 : i32
    %c0_i32_1 = arith.constant 0 : i32
    return %c0_i32, %c0_i32_0 : i32, i32
  }
  func.func @transform_8(%arg0: i32) -> (i32, i32) {
    %c0_i32 = arith.constant 0 : i32
    %c0_i32_0 = arith.constant 0 : i32
    %c0_i32_1 = arith.constant 0 : i32
    return %c0_i32, %c0_i32_0 : i32, i32
  }
  func.func @transform_9(%arg0: i32) -> (i32, i32) {
    %c0_i32 = arith.constant 0 : i32
    %c0_i32_0 = arith.constant 0 : i32
    %c0_i32_1 = arith.constant 0 : i32
    return %c0_i32, %c0_i32_0 : i32, i32
  }
  func.func @transform_10(%arg0: i32) -> (i32, i32) {
    %c0_i32 = arith.constant 0 : i32
    %c0_i32_0 = arith.constant 0 : i32
    %c0_i32_1 = arith.constant 0 : i32
    return %c0_i32, %c0_i32_0 : i32, i32
  }
  func.func @transform_11(%arg0: i32) -> (i32, i32) {
    %c0_i32 = arith.constant 0 : i32
    %c0_i32_0 = arith.constant 0 : i32
    %c0_i32_1 = arith.constant 0 : i32
    return %c0_i32, %c0_i32_0 : i32, i32
  }
  func.func @transform_12(%arg0: i32) -> (i32, i32) {
    %c0_i32 = arith.constant 0 : i32
    %c0_i32_0 = arith.constant 0 : i32
    %c0_i32_1 = arith.constant 0 : i32
    return %c0_i32, %c0_i32_0 : i32, i32
  }
  func.func @transform_13(%arg0: i32) -> (i32, i32) {
    %c0_i32 = arith.constant 0 : i32
    %c0_i32_0 = arith.constant 0 : i32
    %c0_i32_1 = arith.constant 0 : i32
    return %c0_i32, %c0_i32_0 : i32, i32
  }
  func.func @transform_14(%arg0: i32) -> (i32, i32) {
    %c0_i32 = arith.constant 0 : i32
    %c0_i32_0 = arith.constant 0 : i32
    %c0_i32_1 = arith.constant 0 : i32
    return %c0_i32, %c0_i32_0 : i32, i32
  }
  func.func @transform_15(%arg0: i32) -> (i32, i32) {
    %c0_i32 = arith.constant 0 : i32
    %c0_i32_0 = arith.constant 0 : i32
    %c0_i32_1 = arith.constant 0 : i32
    return %c0_i32, %c0_i32_0 : i32, i32
  }
  func.func @transform_16(%arg0: i32) -> (i32, i32, i32) {
    %c0_i32 = arith.constant 0 : i32
    %c0_i32_0 = arith.constant 0 : i32
    %c0_i32_1 = arith.constant 0 : i32
    %c0_i32_2 = arith.constant 0 : i32
    return %c0_i32, %c0_i32_0, %c0_i32_1 : i32, i32, i32
  }
}

</mosaic_0001>

<llo_original>
// kernel: residual_readout.1
$region0: #{residual_readout.1}
  #allocation0 [shape = 'u32[]', space=smem, size = 0x4, offset = 0x4, fixed_abs, tag = 'smem constant byte address 0x4 - core index']
  #allocation1 [shape = 'u32[144,128]{1,0:T(1,128)}', space=vmem, size = 0x12000, scoped, tag = 'internal scratch']
  %s0 = inlined_call_operand.vmem [shape: f32[2,8,32], index: 0, kind: input, shape index: {}]
  %s1 = inlined_call_operand.vmem [shape: f32[2,32], index: 1, kind: input, shape index: {}]
  %s2 = inlined_call_operand.vmem [shape: f32[64,32], index: 2, kind: input, shape index: {}]
  %s3 = inlined_call_operand.vmem [shape: f32[1,64], index: 3, kind: input, shape index: {}]
  %s4 = inlined_call_operand.vmem [shape: f32[128,64], index: 4, kind: input, shape index: {}]
  %s5 = inlined_call_operand.vmem [shape: f32[1,128], index: 5, kind: input, shape index: {}]
  %s6 = inlined_call_operand.vmem [shape: f32[64,128], index: 6, kind: input, shape index: {}]
  %s7 = inlined_call_operand.vmem [shape: f32[1,64], index: 7, kind: input, shape index: {}]
  %s8 = inlined_call_operand.vmem [shape: f32[64,32], index: 8, kind: input, shape index: {}]
  %s9 = inlined_call_operand.vmem [shape: f32[1,64], index: 9, kind: input, shape index: {}]
  %s10 = inlined_call_operand.vmem [shape: f32[32,64], index: 10, kind: input, shape index: {}]
  %s11 = inlined_call_operand.vmem [shape: f32[1,32], index: 11, kind: input, shape index: {}]
  %s12 = inlined_call_operand.vmem [shape: f32[1,32], index: 12, kind: input, shape index: {}]
  %s13 = inlined_call_operand.vmem [shape: f32[1,32], index: 13, kind: input, shape index: {}]
  %s14 = inlined_call_operand.vmem [shape: f32[128,32], index: 14, kind: input, shape index: {}]
  %s15 = inlined_call_operand.vmem [shape: f32[1,128], index: 15, kind: input, shape index: {}]
  %s16 = inlined_call_operand.hbm [shape: f32[2,8,128], index: 16, kind: output, shape index: {}]
  %s17 = sld [smem:[#allocation0]]
  $region74: #{residual_readout.1} parent=0
    _
  %s19 = ssub.s32 1, %s17
  %s20 = scalar_select 0, %s19, %s17
  $region1: #{residual_readout.1} parent=0
    #allocation2 [shape = 'u8[8192]{0}', space=vmem, size = 0x2000, scoped, tag = 'output window, operand 0, single buffered']
    #allocation3 [shape = 's32[1]{0}', space=sflag, size = 0x4, scoped, tag = 'scoped memory for residual_readout.1']
    %21 = vsyncpa [#allocation3], 0
    // Predicated region
    $region2: #{residual_readout.1} parent=1 // pred_check
      _
    $region3: #{residual_readout.1} parent=1 // pred_check_branch
      %23 = sbr.rel (0) target = $region5
    $region4: #{residual_readout.1} parent=1 // pred_region
      _
    $region5: #{residual_readout.1} parent=1 // pred_fallthru
      _
    // Predicated region
    $region6: #{residual_readout.1} parent=1 // pred_check
      _
    $region7: #{residual_readout.1} parent=1 // pred_check_branch
      %25 = sbr.rel (0) target = $region9
    $region8: #{residual_readout.1} parent=1 // pred_region
      _
    $region9: #{residual_readout.1} parent=1 // pred_fallthru
      _
    // Predicated region
    $region10: #{residual_readout.1} parent=1 // pred_check
      _
    $region11: #{residual_readout.1} parent=1 // pred_check_branch
      %27 = sbr.rel (0) target = $region13
    $region12: #{residual_readout.1} parent=1 // pred_region
      _
    $region13: #{residual_readout.1} parent=1 // pred_fallthru
      _
    // Predicated region
    $region14: #{residual_readout.1} parent=1 // pred_check
      _
    $region15: #{residual_readout.1} parent=1 // pred_check_branch
      %29 = sbr.rel (0) target = $region17
    $region16: #{residual_readout.1} parent=1 // pred_region
      _
    $region17: #{residual_readout.1} parent=1 // pred_fallthru
      _
    // Predicated region
    $region18: #{residual_readout.1} parent=1 // pred_check
      _
    $region19: #{residual_readout.1} parent=1 // pred_check_branch
      %31 = sbr.rel (0) target = $region21
    $region20: #{residual_readout.1} parent=1 // pred_region
      _
    $region21: #{residual_readout.1} parent=1 // pred_fallthru
      _
    // Predicated region
    $region22: #{residual_readout.1} parent=1 // pred_check
      _
    $region23: #{residual_readout.1} parent=1 // pred_check_branch
      %33 = sbr.rel (0) target = $region25
    $region24: #{residual_readout.1} parent=1 // pred_region
      _
    $region25: #{residual_readout.1} parent=1 // pred_fallthru
      _
    // Predicated region
    $region26: #{residual_readout.1} parent=1 // pred_check
      _
    $region27: #{residual_readout.1} parent=1 // pred_check_branch
      %35 = sbr.rel (0) target = $region29
    $region28: #{residual_readout.1} parent=1 // pred_region
      _
    $region29: #{residual_readout.1} parent=1 // pred_fallthru
      _
    // Predicated region
    $region30: #{residual_readout.1} parent=1 // pred_check
      _
    $region31: #{residual_readout.1} parent=1 // pred_check_branch
      %37 = sbr.rel (0) target = $region33
    $region32: #{residual_readout.1} parent=1 // pred_region
      _
    $region33: #{residual_readout.1} parent=1 // pred_fallthru
      _
    // Predicated region
    $region34: #{residual_readout.1} parent=1 // pred_check
      _
    $region35: #{residual_readout.1} parent=1 // pred_check_branch
      %39 = sbr.rel (0) target = $region37
    $region36: #{residual_readout.1} parent=1 // pred_region
      _
    $region37: #{residual_readout.1} parent=1 // pred_fallthru
      _
    // Predicated region
    $region38: #{residual_readout.1} parent=1 // pred_check
      _
    $region39: #{residual_readout.1} parent=1 // pred_check_branch
      %41 = sbr.rel (0) target = $region41
    $region40: #{residual_readout.1} parent=1 // pred_region
      _
    $region41: #{residual_readout.1} parent=1 // pred_fallthru
      _
    // Predicated region
    $region42: #{residual_readout.1} parent=1 // pred_check
      _
    $region43: #{residual_readout.1} parent=1 // pred_check_branch
      %43 = sbr.rel (0) target = $region45
    $region44: #{residual_readout.1} parent=1 // pred_region
      _
    $region45: #{residual_readout.1} parent=1 // pred_fallthru
      _
    // Predicated region
    $region46: #{residual_readout.1} parent=1 // pred_check
      _
    $region47: #{residual_readout.1} parent=1 // pred_check_branch
      %45 = sbr.rel (0) target = $region49
    $region48: #{residual_readout.1} parent=1 // pred_region
      _
    $region49: #{residual_readout.1} parent=1 // pred_fallthru
      _
    // Predicated region
    $region50: #{residual_readout.1} parent=1 // pred_check
      _
    $region51: #{residual_readout.1} parent=1 // pred_check_branch
      %47 = sbr.rel (0) target = $region53
    $region52: #{residual_readout.1} parent=1 // pred_region
      _
    $region53: #{residual_readout.1} parent=1 // pred_fallthru
      _
    // Predicated region
    $region54: #{residual_readout.1} parent=1 // pred_check
      _
    $region55: #{residual_readout.1} parent=1 // pred_check_branch
      %49 = sbr.rel (0) target = $region57
    $region56: #{residual_readout.1} parent=1 // pred_region
      _
    $region57: #{residual_readout.1} parent=1 // pred_fallthru
      _
    // Predicated region
    $region58: #{residual_readout.1} parent=1 // pred_check
      _
    $region59: #{residual_readout.1} parent=1 // pred_check_branch
      %51 = sbr.rel (0) target = $region61
    $region60: #{residual_readout.1} parent=1 // pred_region
      _
    $region61: #{residual_readout.1} parent=1 // pred_fallthru
      _
    // Predicated region
    $region62: #{residual_readout.1} parent=1 // pred_check
      _
    $region63: #{residual_readout.1} parent=1 // pred_check_branch
      %53 = sbr.rel (0) target = $region65
    $region64: #{residual_readout.1} parent=1 // pred_region
      _
    $region65: #{residual_readout.1} parent=1 // pred_fallthru
      _
    %v54 = vld [vmem:[%s0] sm:$0xff]
    %v55 = vld [vmem:[%s0 + $0x8] sm:$0xff]
    %v56 = vld [vmem:[%s1] sm:$0x3]
    %v57 = vld [vmem:[%s2] sm:$0xff]
    %v58 = vld [vmem:[%s2 + $0x8] sm:$0xff]
    %v59 = vld [vmem:[%s2 + $0x10] sm:$0xff]
    %v60 = vld [vmem:[%s2 + $0x18] sm:$0xff]
    %v61 = vld [vmem:[%s2 + $0x20] sm:$0xff]
    %v62 = vld [vmem:[%s2 + $0x28] sm:$0xff]
    %v63 = vld [vmem:[%s2 + $0x30] sm:$0xff]
    %v64 = vld [vmem:[%s2 + $0x38] sm:$0xff]
    %v65 = vld [vmem:[%s3] sm:$0x1]
    %v67 = vlaneseq
    %v68 = vshrl.u32 %v67, 7
    %v69 = vsub.s32 0, %v68
    %v70 = vrot.slane %v65, %v69
    %vm72 = vcmask 261120
    %v74 = vsel %vm72, %v56, 0
    %v77 = vsel %vm72, %v57, 0
    %v80 = vsel %vm72, %v58, 0
    %v83 = vsel %vm72, %v59, 0
    %v86 = vsel %vm72, %v60, 0
    %v89 = vsel %vm72, %v61, 0
    %v92 = vsel %vm72, %v62, 0
    %v95 = vsel %vm72, %v63, 0
    %v98 = vsel %vm72, %v64, 0
    %100 = vmatprep.subr.mxu0 0.0
    %101 = vmatpush1.xpose.msra.mxu0 0.0
    %102 = vmatprep.subr.mxu0 0.0
    %103 = vmatpush1.xpose.msra.mxu0 0.0
    %104 = vmatprep.subr.mxu0 0.0
    %105 = vmatpush1.xpose.msra.mxu0 0.0
    %106 = vmatprep.subr.mxu0 0.0
    %107 = vmatpush1.xpose.msra.mxu0 0.0
    %108 = vmatprep.subr.mxu0 0.0
    %109 = vmatpush1.xpose.msra.mxu0 0.0
    %110 = vmatprep.subr.mxu0 0.0
    %111 = vmatpush1.xpose.msra.mxu0 0.0
    %112 = vmatprep.subr.mxu0 0.0
    %113 = vmatpush1.xpose.msra.mxu0 0.0
    %114 = vmatprep.subr.mxu0 0.0
    %115 = vmatpush1.xpose.msra.mxu0 0.0
    %116 = vmatprep.subr.mxu0 0.0
    %117 = vmatpush1.xpose.msra.mxu0 %v98
    %118 = vmatprep.subr.mxu0 0.0
    %119 = vmatpush1.xpose.msra.mxu0 %v95
    %120 = vmatprep.subr.mxu0 0.0
    %121 = vmatpush1.xpose.msra.mxu0 %v92
    %122 = vmatprep.subr.mxu0 0.0
    %123 = vmatpush1.xpose.msra.mxu0 %v89
    %124 = vmatprep.subr.mxu0 0.0
    %125 = vmatpush1.xpose.msra.mxu0 %v86
    %126 = vmatprep.subr.mxu0 0.0
    %127 = vmatpush1.xpose.msra.mxu0 %v83
    %128 = vmatprep.subr.mxu0 0.0
    %129 = vmatpush1.xpose.msra.mxu0 %v80
    %130 = vmatprep.subr.mxu0 0.0
    %131 = vmatpush1.xpose.msra.mxu0 %v77
    %132 = vmatprep.subr.mxu0 0.0
    %133 = vmatpush2.xpose.msra.mxu0 0.0
    %134 = vmatprep.subr.mxu0 0.0
    %135 = vmatpush2.xpose.msra.mxu0 0.0
    %136 = vmatprep.subr.mxu0 0.0
    %137 = vmatpush2.xpose.msra.mxu0 0.0
    %138 = vmatprep.subr.mxu0 0.0
    %139 = vmatpush2.xpose.msra.mxu0 0.0
    %140 = vmatprep.subr.mxu0 0.0
    %141 = vmatpush2.xpose.msra.mxu0 0.0
    %142 = vmatprep.subr.mxu0 0.0
    %143 = vmatpush2.xpose.msra.mxu0 0.0
    %144 = vmatprep.subr.mxu0 0.0
    %145 = vmatpush2.xpose.msra.mxu0 0.0
    %146 = vmatprep.subr.mxu0 0.0
    %147 = vmatpush2.xpose.msra.mxu0 0.0
    %148 = vmatprep.subr.mxu0 0.0
    %149 = vmatpush2.xpose.msra.mxu0 0.0
    %150 = vmatprep.subr.mxu0 0.0
    %151 = vmatpush2.xpose.msra.mxu0 0.0
    %152 = vmatprep.subr.mxu0 0.0
    %153 = vmatpush2.xpose.msra.mxu0 0.0
    %154 = vmatprep.subr.mxu0 0.0
    %155 = vmatpush2.xpose.msra.mxu0 0.0
    %156 = vmatprep.subr.mxu0 0.0
    %157 = vmatpush2.xpose.msra.mxu0 0.0
    %158 = vmatprep.subr.mxu0 0.0
    %159 = vmatpush2.xpose.msra.mxu0 0.0
    %160 = vmatprep.subr.mxu0 0.0
    %161 = vmatpush2.xpose.msra.mxu0 0.0
    %162 = vmatprep.subr.mxu0 0.0
    %163 = vmatpush2.xpose.msra.mxu0 0.0
    %164 = vmatprep.mubr.f32.mxu0 0.0
    %165 = vmatmul.mubr.f32.gmra.mxu0 %v74
    %v166 = vpop.f32.mrf.mxu0
    %v167 = vadd.f32 %v70, %v166
    %v168 = vpop.f32.mrf.mxu0
    %169 = vdwg.mxu0
    %v170 = vmul.f32 %v167, 0.5
    %v171 = vmul.f32 %v167, 0.044715
    %v172 = vmul.f32 %v171, %v167
    %v173 = vmul.f32 %v172, %v167
    %v174 = vadd.f32 %v167, %v173
    %v175 = vmul.f32 %v174, 0.7978846
    %v176 = vtanh.pop %v175
    %v177 = vadd.f32 %v176, 1.0
    %v178 = vmul.f32 %v170, %v177
    %v179 = vld [vmem:[%s4] sm:$0xff]
    %v180 = vld [vmem:[%s4 + $0x8] sm:$0xff]
    %v181 = vld [vmem:[%s4 + $0x10] sm:$0xff]
    %v182 = vld [vmem:[%s4 + $0x18] sm:$0xff]
    %v183 = vld [vmem:[%s4 + $0x20] sm:$0xff]
    %v184 = vld [vmem:[%s4 + $0x28] sm:$0xff]
    %v185 = vld [vmem:[%s4 + $0x30] sm:$0xff]
    %v186 = vld [vmem:[%s4 + $0x38] sm:$0xff]
    %v187 = vld [vmem:[%s4 + $0x40] sm:$0xff]
    %v188 = vld [vmem:[%s4 + $0x48] sm:$0xff]
    %v189 = vld [vmem:[%s4 + $0x50] sm:$0xff]
    %v190 = vld [vmem:[%s4 + $0x58] sm:$0xff]
    %v191 = vld [vmem:[%s4 + $0x60] sm:$0xff]
    %v192 = vld [vmem:[%s4 + $0x68] sm:$0xff]
    %v193 = vld [vmem:[%s4 + $0x70] sm:$0xff]
    %v194 = vld [vmem:[%s4 + $0x78] sm:$0xff]
    %v195 = vld [vmem:[%s5] sm:$0x1]
    %v197 = vlaneseq
    %v198 = vshrl.u32 %v197, 7
    %v199 = vsub.s32 0, %v198
    %v200 = vrot.slane %v195, %v199
    %vm202 = vcmask 523264
    %v204 = vsel %vm202, %v178, 0
    %v207 = vsel %vm202, %v179, 0
    %v210 = vsel %vm202, %v180, 0
    %v213 = vsel %vm202, %v181, 0
    %v216 = vsel %vm202, %v182, 0
    %v219 = vsel %vm202, %v183, 0
    %v222 = vsel %vm202, %v184, 0
    %v225 = vsel %vm202, %v185, 0
    %v228 = vsel %vm202, %v186, 0
    %v231 = vsel %vm202, %v187, 0
    %v234 = vsel %vm202, %v188, 0
    %v237 = vsel %vm202, %v189, 0
    %v240 = vsel %vm202, %v190, 0
    %v243 = vsel %vm202, %v191, 0
    %v246 = vsel %vm202, %v192, 0
    %v249 = vsel %vm202, %v193, 0
    %v252 = vsel %vm202, %v194, 0
    %254 = vmatprep.subr.mxu0 0.0
    %255 = vmatpush1.xpose.msra.mxu0 %v252
    %256 = vmatprep.subr.mxu0 0.0
    %257 = vmatpush1.xpose.msra.mxu0 %v249
    %258 = vmatprep.subr.mxu0 0.0
    %259 = vmatpush1.xpose.msra.mxu0 %v246
    %260 = vmatprep.subr.mxu0 0.0
    %261 = vmatpush1.xpose.msra.mxu0 %v243
    %262 = vmatprep.subr.mxu0 0.0
    %263 = vmatpush1.xpose.msra.mxu0 %v240
    %264 = vmatprep.subr.mxu0 0.0
    %265 = vmatpush1.xpose.msra.mxu0 %v237
    %266 = vmatprep.subr.mxu0 0.0
    %267 = vmatpush1.xpose.msra.mxu0 %v234
    %268 = vmatprep.subr.mxu0 0.0
    %269 = vmatpush1.xpose.msra.mxu0 %v231
    %270 = vmatprep.subr.mxu0 0.0
    %271 = vmatpush1.xpose.msra.mxu0 %v228
    %272 = vmatprep.subr.mxu0 0.0
    %273 = vmatpush1.xpose.msra.mxu0 %v225
    %274 = vmatprep.subr.mxu0 0.0
    %275 = vmatpush1.xpose.msra.mxu0 %v222
    %276 = vmatprep.subr.mxu0 0.0
    %277 = vmatpush1.xpose.msra.mxu0 %v219
    %278 = vmatprep.subr.mxu0 0.0
    %279 = vmatpush1.xpose.msra.mxu0 %v216
    %280 = vmatprep.subr.mxu0 0.0
    %281 = vmatpush1.xpose.msra.mxu0 %v213
    %282 = vmatprep.subr.mxu0 0.0
    %283 = vmatpush1.xpose.msra.mxu0 %v210
    %284 = vmatprep.subr.mxu0 0.0
    %285 = vmatpush1.xpose.msra.mxu0 %v207
    %286 = vmatprep.subr.mxu0 0.0
    %287 = vmatpush2.xpose.msra.mxu0 0.0
    %288 = vmatprep.subr.mxu0 0.0
    %289 = vmatpush2.xpose.msra.mxu0 0.0
    %290 = vmatprep.subr.mxu0 0.0
    %291 = vmatpush2.xpose.msra.mxu0 0.0
    %292 = vmatprep.subr.mxu0 0.0
    %293 = vmatpush2.xpose.msra.mxu0 0.0
    %294 = vmatprep.subr.mxu0 0.0
    %295 = vmatpush2.xpose.msra.mxu0 0.0
    %296 = vmatprep.subr.mxu0 0.0
    %297 = vmatpush2.xpose.msra.mxu0 0.0
    %298 = vmatprep.subr.mxu0 0.0
    %299 = vmatpush2.xpose.msra.mxu0 0.0
    %300 = vmatprep.subr.mxu0 0.0
    %301 = vmatpush2.xpose.msra.mxu0 0.0
    %302 = vmatprep.subr.mxu0 0.0
    %303 = vmatpush2.xpose.msra.mxu0 0.0
    %304 = vmatprep.subr.mxu0 0.0
    %305 = vmatpush2.xpose.msra.mxu0 0.0
    %306 = vmatprep.subr.mxu0 0.0
    %307 = vmatpush2.xpose.msra.mxu0 0.0
    %308 = vmatprep.subr.mxu0 0.0
    %309 = vmatpush2.xpose.msra.mxu0 0.0
    %310 = vmatprep.subr.mxu0 0.0
    %311 = vmatpush2.xpose.msra.mxu0 0.0
    %312 = vmatprep.subr.mxu0 0.0
    %313 = vmatpush2.xpose.msra.mxu0 0.0
    %314 = vmatprep.subr.mxu0 0.0
    %315 = vmatpush2.xpose.msra.mxu0 0.0
    %316 = vmatprep.subr.mxu0 0.0
    %317 = vmatpush2.xpose.msra.mxu0 0.0
    %318 = vmatprep.mubr.f32.mxu0 0.0
    %319 = vmatmul.mubr.f32.gmra.mxu0 %v204
    %v320 = vpop.f32.mrf.mxu0
    %v321 = vadd.f32 %v200, %v320
    %v322 = vpop.f32.mrf.mxu0
    %323 = vdwg.mxu0
    %v324 = vld [vmem:[%s6] sm:$0xff]
    %v325 = vld [vmem:[%s6 + $0x8] sm:$0xff]
    %v326 = vld [vmem:[%s6 + $0x10] sm:$0xff]
    %v327 = vld [vmem:[%s6 + $0x18] sm:$0xff]
    %v328 = vld [vmem:[%s6 + $0x20] sm:$0xff]
    %v329 = vld [vmem:[%s6 + $0x28] sm:$0xff]
    %v330 = vld [vmem:[%s6 + $0x30] sm:$0xff]
    %v331 = vld [vmem:[%s6 + $0x38] sm:$0xff]
    %v332 = vld [vmem:[%s7] sm:$0x1]
    %v334 = vlaneseq
    %v335 = vshrl.u32 %v334, 7
    %v336 = vsub.s32 0, %v335
    %v337 = vrot.slane %v332, %v336
    %339 = vmatprep.subr.mxu0 0.0
    %340 = vmatpush1.xpose.msra.mxu0 0.0
    %341 = vmatprep.subr.mxu0 0.0
    %342 = vmatpush1.xpose.msra.mxu0 0.0
    %343 = vmatprep.subr.mxu0 0.0
    %344 = vmatpush1.xpose.msra.mxu0 0.0
    %345 = vmatprep.subr.mxu0 0.0
    %346 = vmatpush1.xpose.msra.mxu0 0.0
    %347 = vmatprep.subr.mxu0 0.0
    %348 = vmatpush1.xpose.msra.mxu0 0.0
    %349 = vmatprep.subr.mxu0 0.0
    %350 = vmatpush1.xpose.msra.mxu0 0.0
    %351 = vmatprep.subr.mxu0 0.0
    %352 = vmatpush1.xpose.msra.mxu0 0.0
    %353 = vmatprep.subr.mxu0 0.0
    %354 = vmatpush1.xpose.msra.mxu0 0.0
    %355 = vmatprep.subr.mxu0 0.0
    %356 = vmatpush1.xpose.msra.mxu0 %v331
    %357 = vmatprep.subr.mxu0 0.0
    %358 = vmatpush1.xpose.msra.mxu0 %v330
    %359 = vmatprep.subr.mxu0 0.0
    %360 = vmatpush1.xpose.msra.mxu0 %v329
    %361 = vmatprep.subr.mxu0 0.0
    %362 = vmatpush1.xpose.msra.mxu0 %v328
    %363 = vmatprep.subr.mxu0 0.0
    %364 = vmatpush1.xpose.msra.mxu0 %v327
    %365 = vmatprep.subr.mxu0 0.0
    %366 = vmatpush1.xpose.msra.mxu0 %v326
    %367 = vmatprep.subr.mxu0 0.0
    %368 = vmatpush1.xpose.msra.mxu0 %v325
    %369 = vmatprep.subr.mxu0 0.0
    %370 = vmatpush1.xpose.msra.mxu0 %v324
    %371 = vmatprep.subr.mxu0 0.0
    %372 = vmatpush2.xpose.msra.mxu0 0.0
    %373 = vmatprep.subr.mxu0 0.0
    %374 = vmatpush2.xpose.msra.mxu0 0.0
    %375 = vmatprep.subr.mxu0 0.0
    %376 = vmatpush2.xpose.msra.mxu0 0.0
    %377 = vmatprep.subr.mxu0 0.0
    %378 = vmatpush2.xpose.msra.mxu0 0.0
    %379 = vmatprep.subr.mxu0 0.0
    %380 = vmatpush2.xpose.msra.mxu0 0.0
    %381 = vmatprep.subr.mxu0 0.0
    %382 = vmatpush2.xpose.msra.mxu0 0.0
    %383 = vmatprep.subr.mxu0 0.0
    %384 = vmatpush2.xpose.msra.mxu0 0.0
    %385 = vmatprep.subr.mxu0 0.0
    %386 = vmatpush2.xpose.msra.mxu0 0.0
    %387 = vmatprep.subr.mxu0 0.0
    %388 = vmatpush2.xpose.msra.mxu0 0.0
    %389 = vmatprep.subr.mxu0 0.0
    %390 = vmatpush2.xpose.msra.mxu0 0.0
    %391 = vmatprep.subr.mxu0 0.0
    %392 = vmatpush2.xpose.msra.mxu0 0.0
    %393 = vmatprep.subr.mxu0 0.0
    %394 = vmatpush2.xpose.msra.mxu0 0.0
    %395 = vmatprep.subr.mxu0 0.0
    %396 = vmatpush2.xpose.msra.mxu0 0.0
    %397 = vmatprep.subr.mxu0 0.0
    %398 = vmatpush2.xpose.msra.mxu0 0.0
    %399 = vmatprep.subr.mxu0 0.0
    %400 = vmatpush2.xpose.msra.mxu0 0.0
    %401 = vmatprep.subr.mxu0 0.0
    %402 = vmatpush2.xpose.msra.mxu0 0.0
    %403 = vmatprep.mubr.f32.mxu0 0.0
    %404 = vmatmul.mubr.f32.gmra.mxu0 %v321
    %v405 = vpop.f32.mrf.mxu0
    %v406 = vadd.f32 %v337, %v405
    %v407 = vpop.f32.mrf.mxu0
    %408 = vdwg.mxu0
    %v411 = vunpack.c.l.s4 1966171168
    %v412 = vunpack.c.0.s8 %v411
    %v413 = vlaneseq
    %v414 = vshrl.u32 %v413, 7
    %v415 = vsub.s32 %v412, %v414
    %v416 = vrot.slane %v406, %v415
    %v417 = vcombine.high %v416, %v416
    %v419 = vunpack.c.l.s4 1966171168
    %v420 = vunpack.c.0.s8 %v419
    %v421 = vlaneseq
    %v422 = vshrl.u32 %v421, 7
    %v423 = vsub.s32 %v420, %v422
    %v424 = vrot.slane %v416, %v423
    %v426 = vunpack.c.l.s4 1966171168
    %v427 = vunpack.c.0.s8 %v426
    %v428 = vlaneseq
    %v429 = vshrl.u32 %v428, 7
    %v430 = vsub.s32 %v427, %v429
    %v431 = vrot.slane %v417, %v430
    %v432 = vlaneseq
    %v433 = vshrl.u32 %v432, 7
    %v434 = vsub.s32 0, %v433
    %v435 = vrot.slane %v424, %v434
    %v436 = vlaneseq
    %v437 = vshrl.u32 %v436, 7
    %v438 = vsub.s32 0, %v437
    %v439 = vrot.slane %v431, %v438
    %v442 = vld [vmem:[%s12] sm:$0x1]
    %v443 = vld [vmem:[%s13] sm:$0x1]
    %v444 = vld [vmem:[%s8] sm:$0xff]
    %v445 = vld [vmem:[%s8 + $0x8] sm:$0xff]
    %v446 = vld [vmem:[%s8 + $0x10] sm:$0xff]
    %v447 = vld [vmem:[%s8 + $0x18] sm:$0xff]
    %v448 = vld [vmem:[%s8 + $0x20] sm:$0xff]
    %v449 = vld [vmem:[%s8 + $0x28] sm:$0xff]
    %v450 = vld [vmem:[%s8 + $0x30] sm:$0xff]
    %v451 = vld [vmem:[%s8 + $0x38] sm:$0xff]
    %v452 = vld [vmem:[%s9] sm:$0x1]
    %v454 = vlaneseq
    %v455 = vshrl.u32 %v454, 7
    %v456 = vsub.s32 0, %v455
    %v457 = vrot.slane %v452, %v456
    %v460 = vsel %vm72, %v54, 0
    %v463 = vsel %vm72, %v55, 0
    %v466 = vsel %vm72, %v444, 0
    %v469 = vsel %vm72, %v445, 0
    %v472 = vsel %vm72, %v446, 0
    %v475 = vsel %vm72, %v447, 0
    %v478 = vsel %vm72, %v448, 0
    %v481 = vsel %vm72, %v449, 0
    %v484 = vsel %vm72, %v450, 0
    %v487 = vsel %vm72, %v451, 0
    %489 = vmatprep.subr.mxu0 0.0
    %490 = vmatpush1.xpose.msra.mxu0 0.0
    %491 = vmatprep.subr.mxu0 0.0
    %492 = vmatpush1.xpose.msra.mxu0 0.0
    %493 = vmatprep.subr.mxu0 0.0
    %494 = vmatpush1.xpose.msra.mxu0 0.0
    %495 = vmatprep.subr.mxu0 0.0
    %496 = vmatpush1.xpose.msra.mxu0 0.0
    %497 = vmatprep.subr.mxu0 0.0
    %498 = vmatpush1.xpose.msra.mxu0 0.0
    %499 = vmatprep.subr.mxu0 0.0
    %500 = vmatpush1.xpose.msra.mxu0 0.0
    %501 = vmatprep.subr.mxu0 0.0
    %502 = vmatpush1.xpose.msra.mxu0 0.0
    %503 = vmatprep.subr.mxu0 0.0
    %504 = vmatpush1.xpose.msra.mxu0 0.0
    %505 = vmatprep.subr.mxu0 0.0
    %506 = vmatpush1.xpose.msra.mxu0 %v487
    %507 = vmatprep.subr.mxu0 0.0
    %508 = vmatpush1.xpose.msra.mxu0 %v484
    %509 = vmatprep.subr.mxu0 0.0
    %510 = vmatpush1.xpose.msra.mxu0 %v481
    %511 = vmatprep.subr.mxu0 0.0
    %512 = vmatpush1.xpose.msra.mxu0 %v478
    %513 = vmatprep.subr.mxu0 0.0
    %514 = vmatpush1.xpose.msra.mxu0 %v475
    %515 = vmatprep.subr.mxu0 0.0
    %516 = vmatpush1.xpose.msra.mxu0 %v472
    %517 = vmatprep.subr.mxu0 0.0
    %518 = vmatpush1.xpose.msra.mxu0 %v469
    %519 = vmatprep.subr.mxu0 0.0
    %520 = vmatpush1.xpose.msra.mxu0 %v466
    %521 = vmatprep.subr.mxu0 0.0
    %522 = vmatpush2.xpose.msra.mxu0 0.0
    %523 = vmatprep.subr.mxu0 0.0
    %524 = vmatpush2.xpose.msra.mxu0 0.0
    %525 = vmatprep.subr.mxu0 0.0
    %526 = vmatpush2.xpose.msra.mxu0 0.0
    %527 = vmatprep.subr.mxu0 0.0
    %528 = vmatpush2.xpose.msra.mxu0 0.0
    %529 = vmatprep.subr.mxu0 0.0
    %530 = vmatpush2.xpose.msra.mxu0 0.0
    %531 = vmatprep.subr.mxu0 0.0
    %532 = vmatpush2.xpose.msra.mxu0 0.0
    %533 = vmatprep.subr.mxu0 0.0
    %534 = vmatpush2.xpose.msra.mxu0 0.0
    %535 = vmatprep.subr.mxu0 0.0
    %536 = vmatpush2.xpose.msra.mxu0 0.0
    %537 = vmatprep.subr.mxu0 0.0
    %538 = vmatpush2.xpose.msra.mxu0 0.0
    %539 = vmatprep.subr.mxu0 0.0
    %540 = vmatpush2.xpose.msra.mxu0 0.0
    %541 = vmatprep.subr.mxu0 0.0
    %542 = vmatpush2.xpose.msra.mxu0 0.0
    %543 = vmatprep.subr.mxu0 0.0
    %544 = vmatpush2.xpose.msra.mxu0 0.0
    %545 = vmatprep.subr.mxu0 0.0
    %546 = vmatpush2.xpose.msra.mxu0 0.0
    %547 = vmatprep.subr.mxu0 0.0
    %548 = vmatpush2.xpose.msra.mxu0 0.0
    %549 = vmatprep.subr.mxu0 0.0
    %550 = vmatpush2.xpose.msra.mxu0 0.0
    %551 = vmatprep.subr.mxu0 0.0
    %552 = vmatpush2.xpose.msra.mxu0 0.0
    %553 = vmatprep.mubr.f32.mxu0 0.0
    %554 = vmatmul.mubr.f32.gmra.mxu0 %v460
    %v555 = vpop.f32.mrf.mxu0
    %v556 = vadd.f32 %v457, %v555
    %v557 = vpop.f32.mrf.mxu0
    %558 = vmatprep.mubr.f32.mxu0 0.0
    %559 = vmatmul.mubr.f32.gmra.mxu0 %v463
    %v560 = vpop.f32.mrf.mxu0
    %v561 = vadd.f32 %v457, %v560
    %v562 = vpop.f32.mrf.mxu0
    %563 = vdwg.mxu0
    %v564 = vmul.f32 %v556, 0.5
    %v565 = vmul.f32 %v561, 0.5
    %v566 = vmul.f32 %v556, 0.044715
    %v567 = vmul.f32 %v561, 0.044715
    %v568 = vmul.f32 %v566, %v556
    %v569 = vmul.f32 %v567, %v561
    %v570 = vmul.f32 %v568, %v556
    %v571 = vmul.f32 %v569, %v561
    %v572 = vadd.f32 %v556, %v570
    %v573 = vadd.f32 %v561, %v571
    %v574 = vmul.f32 %v572, 0.7978846
    %v575 = vmul.f32 %v573, 0.7978846
    %v576 = vtanh.pop %v574
    %v577 = vtanh.pop %v575
    %v578 = vadd.f32 %v576, 1.0
    %v579 = vadd.f32 %v577, 1.0
    %v580 = vmul.f32 %v564, %v578
    %v581 = vmul.f32 %v565, %v579
    %v582 = vld [vmem:[%s10] sm:$0xff]
    %v583 = vld [vmem:[%s10 + $0x8] sm:$0xff]
    %v584 = vld [vmem:[%s10 + $0x10] sm:$0xff]
    %v585 = vld [vmem:[%s10 + $0x18] sm:$0xff]
    %v586 = vld [vmem:[%s11] sm:$0x1]
    %v588 = vlaneseq
    %v589 = vshrl.u32 %v588, 7
    %v590 = vsub.s32 0, %v589
    %v591 = vrot.slane %v586, %v590
    %v594 = vsel %vm202, %v580, 0
    %v597 = vsel %vm202, %v581, 0
    %v600 = vsel %vm202, %v582, 0
    %v603 = vsel %vm202, %v583, 0
    %v606 = vsel %vm202, %v584, 0
    %v609 = vsel %vm202, %v585, 0
    %611 = vmatprep.subr.mxu0 0.0
    %612 = vmatpush1.xpose.msra.mxu0 0.0
    %613 = vmatprep.subr.mxu0 0.0
    %614 = vmatpush1.xpose.msra.mxu0 0.0
    %615 = vmatprep.subr.mxu0 0.0
    %616 = vmatpush1.xpose.msra.mxu0 0.0
    %617 = vmatprep.subr.mxu0 0.0
    %618 = vmatpush1.xpose.msra.mxu0 0.0
    %619 = vmatprep.subr.mxu0 0.0
    %620 = vmatpush1.xpose.msra.mxu0 0.0
    %621 = vmatprep.subr.mxu0 0.0
    %622 = vmatpush1.xpose.msra.mxu0 0.0
    %623 = vmatprep.subr.mxu0 0.0
    %624 = vmatpush1.xpose.msra.mxu0 0.0
    %625 = vmatprep.subr.mxu0 0.0
    %626 = vmatpush1.xpose.msra.mxu0 0.0
    %627 = vmatprep.subr.mxu0 0.0
    %628 = vmatpush1.xpose.msra.mxu0 0.0
    %629 = vmatprep.subr.mxu0 0.0
    %630 = vmatpush1.xpose.msra.mxu0 0.0
    %631 = vmatprep.subr.mxu0 0.0
    %632 = vmatpush1.xpose.msra.mxu0 0.0
    %633 = vmatprep.subr.mxu0 0.0
    %634 = vmatpush1.xpose.msra.mxu0 0.0
    %635 = vmatprep.subr.mxu0 0.0
    %636 = vmatpush1.xpose.msra.mxu0 %v609
    %637 = vmatprep.subr.mxu0 0.0
    %638 = vmatpush1.xpose.msra.mxu0 %v606
    %639 = vmatprep.subr.mxu0 0.0
    %640 = vmatpush1.xpose.msra.mxu0 %v603
    %641 = vmatprep.subr.mxu0 0.0
    %642 = vmatpush1.xpose.msra.mxu0 %v600
    %643 = vmatprep.subr.mxu0 0.0
    %644 = vmatpush2.xpose.msra.mxu0 0.0
    %645 = vmatprep.subr.mxu0 0.0
    %646 = vmatpush2.xpose.msra.mxu0 0.0
    %647 = vmatprep.subr.mxu0 0.0
    %648 = vmatpush2.xpose.msra.mxu0 0.0
    %649 = vmatprep.subr.mxu0 0.0
    %650 = vmatpush2.xpose.msra.mxu0 0.0
    %651 = vmatprep.subr.mxu0 0.0
    %652 = vmatpush2.xpose.msra.mxu0 0.0
    %653 = vmatprep.subr.mxu0 0.0
    %654 = vmatpush2.xpose.msra.mxu0 0.0
    %655 = vmatprep.subr.mxu0 0.0
    %656 = vmatpush2.xpose.msra.mxu0 0.0
    %657 = vmatprep.subr.mxu0 0.0
    %658 = vmatpush2.xpose.msra.mxu0 0.0
    %659 = vmatprep.subr.mxu0 0.0
    %660 = vmatpush2.xpose.msra.mxu0 0.0
    %661 = vmatprep.subr.mxu0 0.0
    %662 = vmatpush2.xpose.msra.mxu0 0.0
    %663 = vmatprep.subr.mxu0 0.0
    %664 = vmatpush2.xpose.msra.mxu0 0.0
    %665 = vmatprep.subr.mxu0 0.0
    %666 = vmatpush2.xpose.msra.mxu0 0.0
    %667 = vmatprep.subr.mxu0 0.0
    %668 = vmatpush2.xpose.msra.mxu0 0.0
    %669 = vmatprep.subr.mxu0 0.0
    %670 = vmatpush2.xpose.msra.mxu0 0.0
    %671 = vmatprep.subr.mxu0 0.0
    %672 = vmatpush2.xpose.msra.mxu0 0.0
    %673 = vmatprep.subr.mxu0 0.0
    %674 = vmatpush2.xpose.msra.mxu0 0.0
    %675 = vmatprep.mubr.f32.mxu0 0.0
    %676 = vmatmul.mubr.f32.gmra.mxu0 %v594
    %v677 = vpop.f32.mrf.mxu0
    %v678 = vadd.f32 %v591, %v677
    %v679 = vpop.f32.mrf.mxu0
    %680 = vmatprep.mubr.f32.mxu0 0.0
    %681 = vmatmul.mubr.f32.gmra.mxu0 %v597
    %v682 = vpop.f32.mrf.mxu0
    %v683 = vadd.f32 %v591, %v682
    %v684 = vpop.f32.mrf.mxu0
    %685 = vdwg.mxu0
    %v686 = vadd.f32 %v54, %v678
    %v687 = vadd.f32 %v55, %v683
    %v688 = vsel %vm72, %v686, 0.0
    %689 = vadd.xlane.f32.xlu0 %v688
    %v690 = vpop.xlane.xlu0 %689
    %v691 = vsel %vm72, %v687, 0.0
    %692 = vadd.xlane.f32.xlu0 %v691
    %v693 = vpop.xlane.xlu0 %692
    %v694 = vrcp.pop 32.0
    %v695 = vmul.f32 %v690, %v694
    %v696 = vmul.f32 %v693, %v694
    %v697 = vsub.f32 %v686, %v695
    %v698 = vsub.f32 %v687, %v696
    %v699 = vmul.f32 %v697, %v697
    %v700 = vmul.f32 %v698, %v698
    %v701 = vsel %vm72, %v699, 0.0
    %702 = vadd.xlane.f32.xlu0 %v701
    %v703 = vpop.xlane.xlu0 %702
    %v704 = vsel %vm72, %v700, 0.0
    %705 = vadd.xlane.f32.xlu0 %v704
    %v706 = vpop.xlane.xlu0 %705
    %v707 = vmul.f32 %v703, %v694
    %v708 = vmul.f32 %v706, %v694
    %v709 = vadd.f32 %v707, 1e-05
    %v710 = vadd.f32 %v708, 1e-05
    %v711 = vrsqrt.pop %v709
    %v712 = vrsqrt.pop %v710
    %v713 = vmul.f32 %v697, %v711
    %v714 = vmul.f32 %v698, %v712
    %v716 = vlaneseq
    %v717 = vshrl.u32 %v716, 7
    %v718 = vsub.s32 0, %v717
    %v719 = vrot.slane %v442, %v718
    %v721 = vmul.f32 %v713, %v719
    %v722 = vmul.f32 %v714, %v719
    %v724 = vlaneseq
    %v725 = vshrl.u32 %v724, 7
    %v726 = vsub.s32 0, %v725
    %v727 = vrot.slane %v443, %v726
    %v729 = vadd.f32 %v721, %v727
    %v730 = vadd.f32 %v722, %v727
    %v731 = vmul.f32 %v435, %v729
    %v732 = vmul.f32 %v439, %v730
    %733 = vrot.lane.b32.xlu0 %v435, 96
    %v734 = vpop.permute.xlu0 %733
    %735 = vrot.lane.b32.xlu0 %v439, 96
    %v736 = vpop.permute.xlu0 %735
    %v739 = vadd.f32 %v731, %v734
    %v740 = vadd.f32 %v732, %v736
    %v742 = vsel %vm72, %v739, 0
    %v745 = vsel %vm72, %v740, 0
    %747 = vmatprep.subr.mxu0 0.0
    %748 = vmatpush1.xpose.msra.mxu0 0.0
    %749 = vmatprep.subr.mxu0 0.0
    %750 = vmatpush1.xpose.msra.mxu0 0.0
    %751 = vmatprep.subr.mxu0 0.0
    %752 = vmatpush1.xpose.msra.mxu0 0.0
    %753 = vmatprep.subr.mxu0 0.0
    %754 = vmatpush1.xpose.msra.mxu0 0.0
    %755 = vmatprep.subr.mxu0 0.0
    %756 = vmatpush1.xpose.msra.mxu0 0.0
    %757 = vmatprep.subr.mxu0 0.0
    %758 = vmatpush1.xpose.msra.mxu0 0.0
    %759 = vmatprep.subr.mxu0 0.0
    %760 = vmatpush1.xpose.msra.mxu0 0.0
    %761 = vmatprep.subr.mxu0 0.0
    %762 = vmatpush1.xpose.msra.mxu0 0.0
    %763 = vmatprep.subr.mxu0 0.0
    %764 = vmatpush1.xpose.msra.mxu0 %v487
    %765 = vmatprep.subr.mxu0 0.0
    %766 = vmatpush1.xpose.msra.mxu0 %v484
    %767 = vmatprep.subr.mxu0 0.0
    %768 = vmatpush1.xpose.msra.mxu0 %v481
    %769 = vmatprep.subr.mxu0 0.0
    %770 = vmatpush1.xpose.msra.mxu0 %v478
    %771 = vmatprep.subr.mxu0 0.0
    %772 = vmatpush1.xpose.msra.mxu0 %v475
    %773 = vmatprep.subr.mxu0 0.0
    %774 = vmatpush1.xpose.msra.mxu0 %v472
    %775 = vmatprep.subr.mxu0 0.0
    %776 = vmatpush1.xpose.msra.mxu0 %v469
    %777 = vmatprep.subr.mxu0 0.0
    %778 = vmatpush1.xpose.msra.mxu0 %v466
    %779 = vmatprep.subr.mxu0 0.0
    %780 = vmatpush2.xpose.msra.mxu0 0.0
    %781 = vmatprep.subr.mxu0 0.0
    %782 = vmatpush2.xpose.msra.mxu0 0.0
    %783 = vmatprep.subr.mxu0 0.0
    %784 = vmatpush2.xpose.msra.mxu0 0.0
    %785 = vmatprep.subr.mxu0 0.0
    %786 = vmatpush2.xpose.msra.mxu0 0.0
    %787 = vmatprep.subr.mxu0 0.0
    %788 = vmatpush2.xpose.msra.mxu0 0.0
    %789 = vmatprep.subr.mxu0 0.0
    %790 = vmatpush2.xpose.msra.mxu0 0.0
    %791 = vmatprep.subr.mxu0 0.0
    %792 = vmatpush2.xpose.msra.mxu0 0.0
    %793 = vmatprep.subr.mxu0 0.0
    %794 = vmatpush2.xpose.msra.mxu0 0.0
    %795 = vmatprep.subr.mxu0 0.0
    %796 = vmatpush2.xpose.msra.mxu0 0.0
    %797 = vmatprep.subr.mxu0 0.0
    %798 = vmatpush2.xpose.msra.mxu0 0.0
    %799 = vmatprep.subr.mxu0 0.0
    %800 = vmatpush2.xpose.msra.mxu0 0.0
    %801 = vmatprep.subr.mxu0 0.0
    %802 = vmatpush2.xpose.msra.mxu0 0.0
    %803 = vmatprep.subr.mxu0 0.0
    %804 = vmatpush2.xpose.msra.mxu0 0.0
    %805 = vmatprep.subr.mxu0 0.0
    %806 = vmatpush2.xpose.msra.mxu0 0.0
    %807 = vmatprep.subr.mxu0 0.0
    %808 = vmatpush2.xpose.msra.mxu0 0.0
    %809 = vmatprep.subr.mxu0 0.0
    %810 = vmatpush2.xpose.msra.mxu0 0.0
    %811 = vmatprep.mubr.f32.mxu0 0.0
    %812 = vmatmul.mubr.f32.gmra.mxu0 %v742
    %v813 = vpop.f32.mrf.mxu0
    %v814 = vadd.f32 %v457, %v813
    %v815 = vpop.f32.mrf.mxu0
    %816 = vmatprep.mubr.f32.mxu0 0.0
    %817 = vmatmul.mubr.f32.gmra.mxu0 %v745
    %v818 = vpop.f32.mrf.mxu0
    %v819 = vadd.f32 %v457, %v818
    %v820 = vpop.f32.mrf.mxu0
    %821 = vdwg.mxu0
    %v822 = vmul.f32 %v814, 0.5
    %v823 = vmul.f32 %v819, 0.5
    %v824 = vmul.f32 %v814, 0.044715
    %v825 = vmul.f32 %v819, 0.044715
    %v826 = vmul.f32 %v824, %v814
    %v827 = vmul.f32 %v825, %v819
    %v828 = vmul.f32 %v826, %v814
    %v829 = vmul.f32 %v827, %v819
    %v830 = vadd.f32 %v814, %v828
    %v831 = vadd.f32 %v819, %v829
    %v832 = vmul.f32 %v830, 0.7978846
    %v833 = vmul.f32 %v831, 0.7978846
    %v834 = vtanh.pop %v832
    %v835 = vtanh.pop %v833
    %v836 = vadd.f32 %v834, 1.0
    %v837 = vadd.f32 %v835, 1.0
    %v838 = vmul.f32 %v822, %v836
    %v839 = vmul.f32 %v823, %v837
    %v841 = vsel %vm202, %v838, 0
    %v844 = vsel %vm202, %v839, 0
    %846 = vmatprep.subr.mxu0 0.0
    %847 = vmatpush1.xpose.msra.mxu0 0.0
    %848 = vmatprep.subr.mxu0 0.0
    %849 = vmatpush1.xpose.msra.mxu0 0.0
    %850 = vmatprep.subr.mxu0 0.0
    %851 = vmatpush1.xpose.msra.mxu0 0.0
    %852 = vmatprep.subr.mxu0 0.0
    %853 = vmatpush1.xpose.msra.mxu0 0.0
    %854 = vmatprep.subr.mxu0 0.0
    %855 = vmatpush1.xpose.msra.mxu0 0.0
    %856 = vmatprep.subr.mxu0 0.0
    %857 = vmatpush1.xpose.msra.mxu0 0.0
    %858 = vmatprep.subr.mxu0 0.0
    %859 = vmatpush1.xpose.msra.mxu0 0.0
    %860 = vmatprep.subr.mxu0 0.0
    %861 = vmatpush1.xpose.msra.mxu0 0.0
    %862 = vmatprep.subr.mxu0 0.0
    %863 = vmatpush1.xpose.msra.mxu0 0.0
    %864 = vmatprep.subr.mxu0 0.0
    %865 = vmatpush1.xpose.msra.mxu0 0.0
    %866 = vmatprep.subr.mxu0 0.0
    %867 = vmatpush1.xpose.msra.mxu0 0.0
    %868 = vmatprep.subr.mxu0 0.0
    %869 = vmatpush1.xpose.msra.mxu0 0.0
    %870 = vmatprep.subr.mxu0 0.0
    %871 = vmatpush1.xpose.msra.mxu0 %v609
    %872 = vmatprep.subr.mxu0 0.0
    %873 = vmatpush1.xpose.msra.mxu0 %v606
    %874 = vmatprep.subr.mxu0 0.0
    %875 = vmatpush1.xpose.msra.mxu0 %v603
    %876 = vmatprep.subr.mxu0 0.0
    %877 = vmatpush1.xpose.msra.mxu0 %v600
    %878 = vmatprep.subr.mxu0 0.0
    %879 = vmatpush2.xpose.msra.mxu0 0.0
    %880 = vmatprep.subr.mxu0 0.0
    %881 = vmatpush2.xpose.msra.mxu0 0.0
    %882 = vmatprep.subr.mxu0 0.0
    %883 = vmatpush2.xpose.msra.mxu0 0.0
    %884 = vmatprep.subr.mxu0 0.0
    %885 = vmatpush2.xpose.msra.mxu0 0.0
    %886 = vmatprep.subr.mxu0 0.0
    %887 = vmatpush2.xpose.msra.mxu0 0.0
    %888 = vmatprep.subr.mxu0 0.0
    %889 = vmatpush2.xpose.msra.mxu0 0.0
    %890 = vmatprep.subr.mxu0 0.0
    %891 = vmatpush2.xpose.msra.mxu0 0.0
    %892 = vmatprep.subr.mxu0 0.0
    %893 = vmatpush2.xpose.msra.mxu0 0.0
    %894 = vmatprep.subr.mxu0 0.0
    %895 = vmatpush2.xpose.msra.mxu0 0.0
    %896 = vmatprep.subr.mxu0 0.0
    %897 = vmatpush2.xpose.msra.mxu0 0.0
    %898 = vmatprep.subr.mxu0 0.0
    %899 = vmatpush2.xpose.msra.mxu0 0.0
    %900 = vmatprep.subr.mxu0 0.0
    %901 = vmatpush2.xpose.msra.mxu0 0.0
    %902 = vmatprep.subr.mxu0 0.0
    %903 = vmatpush2.xpose.msra.mxu0 0.0
    %904 = vmatprep.subr.mxu0 0.0
    %905 = vmatpush2.xpose.msra.mxu0 0.0
    %906 = vmatprep.subr.mxu0 0.0
    %907 = vmatpush2.xpose.msra.mxu0 0.0
    %908 = vmatprep.subr.mxu0 0.0
    %909 = vmatpush2.xpose.msra.mxu0 0.0
    %910 = vmatprep.mubr.f32.mxu0 0.0
    %911 = vmatmul.mubr.f32.gmra.mxu0 %v841
    %v912 = vpop.f32.mrf.mxu0
    %v913 = vadd.f32 %v591, %v912
    %v914 = vpop.f32.mrf.mxu0
    %915 = vmatprep.mubr.f32.mxu0 0.0
    %916 = vmatmul.mubr.f32.gmra.mxu0 %v844
    %v917 = vpop.f32.mrf.mxu0
    %v918 = vadd.f32 %v591, %v917
    %v919 = vpop.f32.mrf.mxu0
    %920 = vdwg.mxu0
    %v921 = vadd.f32 %v739, %v913
    %v922 = vadd.f32 %v740, %v918
    %v923 = vsel %vm72, %v921, 0.0
    %924 = vadd.xlane.f32.xlu0 %v923
    %v925 = vpop.xlane.xlu0 %924
    %v926 = vsel %vm72, %v922, 0.0
    %927 = vadd.xlane.f32.xlu0 %v926
    %v928 = vpop.xlane.xlu0 %927
    %v929 = vmul.f32 %v925, %v694
    %v930 = vmul.f32 %v928, %v694
    %v931 = vsub.f32 %v921, %v929
    %v932 = vsub.f32 %v922, %v930
    %v933 = vmul.f32 %v931, %v931
    %v934 = vmul.f32 %v932, %v932
    %v935 = vsel %vm72, %v933, 0.0
    %936 = vadd.xlane.f32.xlu0 %v935
    %v937 = vpop.xlane.xlu0 %936
    %v938 = vsel %vm72, %v934, 0.0
    %939 = vadd.xlane.f32.xlu0 %v938
    %v940 = vpop.xlane.xlu0 %939
    %v941 = vmul.f32 %v937, %v694
    %v942 = vmul.f32 %v940, %v694
    %v943 = vadd.f32 %v941, 1e-05
    %v944 = vadd.f32 %v942, 1e-05
    %v945 = vrsqrt.pop %v943
    %v946 = vrsqrt.pop %v944
    %v947 = vmul.f32 %v931, %v945
    %v948 = vmul.f32 %v932, %v946
    %v949 = vmul.f32 %v947, %v719
    %v950 = vmul.f32 %v948, %v719
    %v951 = vadd.f32 %v949, %v727
    %v952 = vadd.f32 %v950, %v727
    %v953 = vmul.f32 %v435, %v951
    %v954 = vmul.f32 %v439, %v952
    %v955 = vadd.f32 %v953, %v734
    %v956 = vadd.f32 %v954, %v736
    %v957 = vld [vmem:[%s14] sm:$0xff]
    %v958 = vld [vmem:[%s14 + $0x8] sm:$0xff]
    %v959 = vld [vmem:[%s14 + $0x10] sm:$0xff]
    %v960 = vld [vmem:[%s14 + $0x18] sm:$0xff]
    %v961 = vld [vmem:[%s14 + $0x20] sm:$0xff]
    %v962 = vld [vmem:[%s14 + $0x28] sm:$0xff]
    %v963 = vld [vmem:[%s14 + $0x30] sm:$0xff]
    %v964 = vld [vmem:[%s14 + $0x38] sm:$0xff]
    %v965 = vld [vmem:[%s14 + $0x40] sm:$0xff]
    %v966 = vld [vmem:[%s14 + $0x48] sm:$0xff]
    %v967 = vld [vmem:[%s14 + $0x50] sm:$0xff]
    %v968 = vld [vmem:[%s14 + $0x58] sm:$0xff]
    %v969 = vld [vmem:[%s14 + $0x60] sm:$0xff]
    %v970 = vld [vmem:[%s14 + $0x68] sm:$0xff]
    %v971 = vld [vmem:[%s14 + $0x70] sm:$0xff]
    %v972 = vld [vmem:[%s14 + $0x78] sm:$0xff]
    %v973 = vld [vmem:[%s15] sm:$0x1]
    %v975 = vlaneseq
    %v976 = vshrl.u32 %v975, 7
    %v977 = vsub.s32 0, %v976
    %v978 = vrot.slane %v973, %v977
    %v981 = vsel %vm72, %v955, 0
    %v984 = vsel %vm72, %v956, 0
    %v987 = vsel %vm72, %v957, 0
    %v990 = vsel %vm72, %v958, 0
    %v993 = vsel %vm72, %v959, 0
    %v996 = vsel %vm72, %v960, 0
    %v999 = vsel %vm72, %v961, 0
    %v1002 = vsel %vm72, %v962, 0
    %v1005 = vsel %vm72, %v963, 0
    %v1008 = vsel %vm72, %v964, 0
    %v1011 = vsel %vm72, %v965, 0
    %v1014 = vsel %vm72, %v966, 0
    %v1017 = vsel %vm72, %v967, 0
    %v1020 = vsel %vm72, %v968, 0
    %v1023 = vsel %vm72, %v969, 0
    %v1026 = vsel %vm72, %v970, 0
    %v1029 = vsel %vm72, %v971, 0
    %v1032 = vsel %vm72, %v972, 0
    %1034 = vmatprep.subr.mxu0 0.0
    %1035 = vmatpush1.xpose.msra.mxu0 %v1032
    %1036 = vmatprep.subr.mxu0 0.0
    %1037 = vmatpush1.xpose.msra.mxu0 %v1029
    %1038 = vmatprep.subr.mxu0 0.0
    %1039 = vmatpush1.xpose.msra.mxu0 %v1026
    %1040 = vmatprep.subr.mxu0 0.0
    %1041 = vmatpush1.xpose.msra.mxu0 %v1023
    %1042 = vmatprep.subr.mxu0 0.0
    %1043 = vmatpush1.xpose.msra.mxu0 %v1020
    %1044 = vmatprep.subr.mxu0 0.0
    %1045 = vmatpush1.xpose.msra.mxu0 %v1017
    %1046 = vmatprep.subr.mxu0 0.0
    %1047 = vmatpush1.xpose.msra.mxu0 %v1014
    %1048 = vmatprep.subr.mxu0 0.0
    %1049 = vmatpush1.xpose.msra.mxu0 %v1011
    %1050 = vmatprep.subr.mxu0 0.0
    %1051 = vmatpush1.xpose.msra.mxu0 %v1008
    %1052 = vmatprep.subr.mxu0 0.0
    %1053 = vmatpush1.xpose.msra.mxu0 %v1005
    %1054 = vmatprep.subr.mxu0 0.0
    %1055 = vmatpush1.xpose.msra.mxu0 %v1002
    %1056 = vmatprep.subr.mxu0 0.0
    %1057 = vmatpush1.xpose.msra.mxu0 %v999
    %1058 = vmatprep.subr.mxu0 0.0
    %1059 = vmatpush1.xpose.msra.mxu0 %v996
    %1060 = vmatprep.subr.mxu0 0.0
    %1061 = vmatpush1.xpose.msra.mxu0 %v993
    %1062 = vmatprep.subr.mxu0 0.0
    %1063 = vmatpush1.xpose.msra.mxu0 %v990
    %1064 = vmatprep.subr.mxu0 0.0
    %1065 = vmatpush1.xpose.msra.mxu0 %v987
    %1066 = vmatprep.subr.mxu0 0.0
    %1067 = vmatpush2.xpose.msra.mxu0 0.0
    %1068 = vmatprep.subr.mxu0 0.0
    %1069 = vmatpush2.xpose.msra.mxu0 0.0
    %1070 = vmatprep.subr.mxu0 0.0
    %1071 = vmatpush2.xpose.msra.mxu0 0.0
    %1072 = vmatprep.subr.mxu0 0.0
    %1073 = vmatpush2.xpose.msra.mxu0 0.0
    %1074 = vmatprep.subr.mxu0 0.0
    %1075 = vmatpush2.xpose.msra.mxu0 0.0
    %1076 = vmatprep.subr.mxu0 0.0
    %1077 = vmatpush2.xpose.msra.mxu0 0.0
    %1078 = vmatprep.subr.mxu0 0.0
    %1079 = vmatpush2.xpose.msra.mxu0 0.0
    %1080 = vmatprep.subr.mxu0 0.0
    %1081 = vmatpush2.xpose.msra.mxu0 0.0
    %1082 = vmatprep.subr.mxu0 0.0
    %1083 = vmatpush2.xpose.msra.mxu0 0.0
    %1084 = vmatprep.subr.mxu0 0.0
    %1085 = vmatpush2.xpose.msra.mxu0 0.0
    %1086 = vmatprep.subr.mxu0 0.0
    %1087 = vmatpush2.xpose.msra.mxu0 0.0
    %1088 = vmatprep.subr.mxu0 0.0
    %1089 = vmatpush2.xpose.msra.mxu0 0.0
    %1090 = vmatprep.subr.mxu0 0.0
    %1091 = vmatpush2.xpose.msra.mxu0 0.0
    %1092 = vmatprep.subr.mxu0 0.0
    %1093 = vmatpush2.xpose.msra.mxu0 0.0
    %1094 = vmatprep.subr.mxu0 0.0
    %1095 = vmatpush2.xpose.msra.mxu0 0.0
    %1096 = vmatprep.subr.mxu0 0.0
    %1097 = vmatpush2.xpose.msra.mxu0 0.0
    %1098 = vmatprep.mubr.f32.mxu0 0.0
    %1099 = vmatmul.mubr.f32.gmra.mxu0 %v981
    %v1100 = vpop.f32.mrf.mxu0
    %v1101 = vadd.f32 %v978, %v1100
    %v1102 = vpop.f32.mrf.mxu0
    %1103 = vmatprep.mubr.f32.mxu0 0.0
    %1104 = vmatmul.mubr.f32.gmra.mxu0 %v984
    %v1105 = vpop.f32.mrf.mxu0
    %v1106 = vadd.f32 %v978, %v1105
    %v1107 = vpop.f32.mrf.mxu0
    %1108 = vdwg.mxu0
    %1109 = vst [vmem:[#allocation2] sm:$0xff] %v1101
    %1110 = vst [vmem:[#allocation2 + $0x8] sm:$0xff] %v1106
    // Predicated region
    $region66: #{residual_readout.1} parent=1 // pred_check
      _
    $region67: #{residual_readout.1} parent=1 // pred_check_branch
      %1112 = sbr.rel (0) target = $region69
    $region68: #{residual_readout.1} parent=1 // pred_region
      %s1114 = ssub.s32 256, 256
      %1115 = vsyncadd [#allocation3], %s1114
      %s1116 = sshll.u32 [#allocation2], 4
      %s1117 = int_to_ptr.vmem [resolvable:$true] %s1116
      %1122 = dma.vmem_to_hbm [thread:$0]  %s1117, 256, %s16, [#allocation3], 128, 128, 8
    $region69: #{residual_readout.1} parent=1 // pred_fallthru
      _
    // Predicated region
    $region70: #{residual_readout.1} parent=1 // pred_check
      _
    $region71: #{residual_readout.1} parent=1 // pred_check_branch
      %1124 = sbr.rel (0) target = $region73
    $region72: #{residual_readout.1} parent=1 // pred_region
      %1125 = dma.done [#allocation3], 256
    $region73: #{residual_readout.1} parent=1 // pred_fallthru
      _
    %1126 = vsyncpa [#allocation3], 1

</llo_original>
